<compile_context>
chip_gen: v6e
topology: v6e:2x2x1
jax: 0.10.0
libtpu: 0.0.40
codegen_flags: <defaults>
</compile_context>

<pallas_src>
import jax
import jax.numpy as jnp
from jax.experimental import pallas as pl
from jax.experimental.pallas import tpu as pltpu


def temporal_attention_kernel(x_ref, params_ref, att_ref, wts_ref):
    # x_ref     : (BT, C, P)   block of batch elements, channel-major (PyTorch layout)
    # params_ref: (C+2, C)     rows [0:C]=W1^T, row C=b1, row C+1=w2 (the C->1 weight row)
    # att_ref   : (BT, C)      attended output (lane-dense)
    # wts_ref   : (BT, P)      attention weights output (lane-dense)
    BT, C, P = x_ref.shape

    params = params_ref[...]                     # (C+2, C)
    w1t = params[:C, :]                          # (C, C)  == W1^T
    b1 = params[C:C + 1, :]                      # (1, C)
    w2 = params[C + 1:C + 2, :]                  # (1, C)

    # Fused transpose: (BT, C, P) -> (BT, P, C), hidden dim on lanes.
    xt = jnp.transpose(x_ref[...], (0, 2, 1))    # (BT, P, C)

    # First Linear + tanh as one flat MXU matmul over all (batch, PLD) rows.
    h = jnp.tanh(
        jnp.dot(xt.reshape(BT * P, C), w1t,
                preferred_element_type=jnp.float32) + b1)        # (BT*P, C)

    # Second Linear (C -> 1) as VPU multiply + lane reduction (no 1-wide MXU
    # matmul).  b2 is dropped: a constant score shift is cancelled by softmax.
    s = jnp.sum(h.reshape(BT, P, C) * w2, axis=-1)               # (BT, P)

    # Softmax over the PLD axis (lanes).
    m = jnp.max(s, axis=-1, keepdims=True)                       # (BT, 1)
    e = jnp.exp(s - m)                                           # (BT, P)
    # approx=False keeps the 1e-5 comparison tight; approx=True is available
    # if the tolerance budget allows.
    w = e * pl.reciprocal(jnp.sum(e, axis=-1, keepdims=True), approx=False)

    # attended[b, c] = sum_p w[b, p] * xt[b, p, c]  (sublane reduce over P).
    att_ref[...] = jnp.sum(xt * w[:, :, None], axis=1)           # (BT, C)
    wts_ref[...] = w                                             # (BT, P)


def temporal_attention(x, w1, b1, w2, b2=None, *, block_b=128):
    """x: (B, C, P) f32.  w1: (C, C), b1: (C,), w2: (1, C), b2: (1,) [inert].

    Returns (attended (B, C), weights (B, P)), matching the PyTorch module.
    """
    del b2  # softmax is shift-invariant: the final bias affects neither output
    B, C, P = x.shape
    BT = min(B, block_b)
    nb = pl.cdiv(B, BT)
    Bp = nb * BT
    if Bp != B:
        x = jnp.pad(x, ((0, Bp - B), (0, 0), (0, 0)))

    # Pack all parameters into one (C+2, C) block: W1^T rows, then b1, then w2.
    params = jnp.concatenate(
        [jnp.transpose(w1), b1.reshape(1, C), w2.reshape(1, C)], axis=0)

    att, wts = pl.pallas_call(
        temporal_attention_kernel,
        out_shape=(
            jax.ShapeDtypeStruct((Bp, C), jnp.float32),
            jax.ShapeDtypeStruct((Bp, P), jnp.float32),
        ),
        grid_spec=pltpu.PrefetchScalarGridSpec(
            num_scalar_prefetch=0,
            grid=(nb,),
            in_specs=[
                pl.BlockSpec((BT, C, P), lambda b: (b, 0, 0)),
                pl.BlockSpec((C + 2, C), lambda b: (0, 0)),
            ],
            out_specs=[
                pl.BlockSpec((BT, C), lambda b: (b, 0)),
                pl.BlockSpec((BT, P), lambda b: (b, 0)),
            ],
        ),
        compiler_params=pltpu.CompilerParams(
            dimension_semantics=("parallel",)),
    )(x, params)

    if Bp != B:
        att = att[:B]
        wts = wts[:B]
    return att, wts


def temporal_attention_ref(x, w1, b1, w2, b2):
    """Pure-JAX reference mirroring the PyTorch forward (keeps b2)."""
    xt = jnp.transpose(x, (0, 2, 1))                          # (B, P, C)
    h = jnp.tanh(jnp.einsum('bpc,oc->bpo', xt, w1) + b1)      # (B, P, C)
    s = jnp.einsum('bpc,oc->bpo', h, w2) + b2                 # (B, P, 1)
    w = jax.nn.softmax(s[..., 0], axis=1)                     # (B, P)
    attended = jnp.einsum('bp,bpc->bc', w, xt)                # (B, C)
    return attended, w


if __name__ == "__main__":
    # n_plds = 8, hidden_dim = channels = 32, batch = 2
    B, C, P = 2, 32, 8
    key = jax.random.PRNGKey(0)
    kx, kw1, kb1, kw2, kb2 = jax.random.split(key, 5)

    x = jax.random.normal(kx, (B, C, P), dtype=jnp.float32)

    # PyTorch weight layout: (out_features, in_features).
    lim1 = 1.0 / (C ** 0.5)
    w1 = jax.random.uniform(kw1, (C, C), jnp.float32, -lim1, lim1)
    b1 = jax.random.uniform(kb1, (C,), jnp.float32, -lim1, lim1)
    w2 = jax.random.uniform(kw2, (1, C), jnp.float32, -lim1, lim1)
    b2 = jax.random.uniform(kb2, (1,), jnp.float32, -lim1, lim1)

    attended, weights = temporal_attention(x, w1, b1, w2, b2)
    jax.block_until_ready((attended, weights))

    att_ref, w_ref = temporal_attention_ref(x, w1, b1, w2, b2)
    assert attended.shape == (B, C) and weights.shape == (B, P)
    assert jnp.allclose(attended, att_ref, atol=1e-5, rtol=1e-5)
    assert jnp.allclose(weights, w_ref, atol=1e-5, rtol=1e-5)

    print("KERNEL_OK")
</pallas_src>

<mosaic_0001>
module attributes {stable_mosaic.version = 11 : i64} {
  func.func @temporal_attention_kernel(%arg0: i32, %arg1: memref<2x32x8xf32, #tpu.memory_space<vmem>>, %arg2: memref<34x32xf32, #tpu.memory_space<vmem>>, %arg3: memref<2x32xf32, #tpu.memory_space<vmem>>, %arg4: memref<2x8xf32, #tpu.memory_space<vmem>>) attributes {dimension_semantics = [#tpu.dimension_semantics<parallel>], iteration_bounds = array<i64: 1>, scalar_prefetch = 0 : i64, scratch_operands = 0 : i64, tpu.core_type = #tpu.core_type<tc>, window_params = [{transform_indices = @transform_0, window_bounds = array<i64: 2, 32, 8>}, {pipeline_mode = #tpu.pipeline_mode<synchronous>, transform_indices = @transform_1, window_bounds = array<i64: 34, 32>}, {transform_indices = @transform_2, window_bounds = array<i64: 2, 32>}, {transform_indices = @transform_3, window_bounds = array<i64: 2, 8>}]} {
    %c0 = arith.constant 0 : index
    %c0_0 = arith.constant 0 : index
    %0 = vector.load %arg2[%c0, %c0_0] : memref<34x32xf32, #tpu.memory_space<vmem>>, vector<34x32xf32>
    %1 = vector.extract_strided_slice %0 {offsets = [0, 0], sizes = [32, 32], strides = [1, 1]} : vector<34x32xf32> to vector<32x32xf32>
    %2 = vector.extract_strided_slice %0 {offsets = [32, 0], sizes = [1, 32], strides = [1, 1]} : vector<34x32xf32> to vector<1x32xf32>
    %3 = vector.extract_strided_slice %0 {offsets = [33, 0], sizes = [1, 32], strides = [1, 1]} : vector<34x32xf32> to vector<1x32xf32>
    %c0_1 = arith.constant 0 : index
    %c0_2 = arith.constant 0 : index
    %c0_3 = arith.constant 0 : index
    %4 = vector.load %arg1[%c0_1, %c0_2, %c0_3] : memref<2x32x8xf32, #tpu.memory_space<vmem>>, vector<2x32x8xf32>
    %5 = tpu.transpose %4, [0, 2, 1] : vector<2x32x8xf32> -> vector<2x8x32xf32>
    %6 = vector.shape_cast %5 : vector<2x8x32xf32> to vector<16x32xf32>
    %cst = arith.constant dense<0.000000e+00> : vector<16x32xf32>
    %7 = tpu.matmul %6, %1, %cst {dimension_numbers = #tpu.dot_dimension_numbers<[1], [0], [0], [1], [0, 0, 1, 1], [], []>} : vector<16x32xf32>, vector<32x32xf32>, vector<16x32xf32> -> vector<16x32xf32>
    %8 = vector.broadcast %2 : vector<1x32xf32> to vector<16x32xf32>
    %9 = arith.addf %7, %8 : vector<16x32xf32>
    %10 = math.tanh %9 : vector<16x32xf32>
    %11 = vector.shape_cast %10 : vector<16x32xf32> to vector<2x8x32xf32>
    %12 = vector.shape_cast %3 : vector<1x32xf32> to vector<1x1x32xf32>
    %13 = vector.broadcast %12 : vector<1x1x32xf32> to vector<2x8x32xf32>
    %14 = arith.mulf %11, %13 : vector<2x8x32xf32>
    %cst_4 = arith.constant dense<0.000000e+00> : vector<2x8xf32>
    %15 = vector.multi_reduction <add>, %14, %cst_4 [2] : vector<2x8x32xf32> to vector<2x8xf32>
    %cst_5 = arith.constant dense<0xFF800000> : vector<2xf32>
    %16 = vector.multi_reduction <maximumf>, %15, %cst_5 [1] : vector<2x8xf32> to vector<2xf32>
    %17 = vector.shape_cast %16 : vector<2xf32> to vector<2x1xf32>
    %18 = vector.broadcast %17 : vector<2x1xf32> to vector<2x8xf32>
    %19 = arith.subf %15, %18 : vector<2x8xf32>
    %20 = math.exp %19 : vector<2x8xf32>
    %cst_6 = arith.constant dense<0.000000e+00> : vector<2xf32>
    %21 = vector.multi_reduction <add>, %20, %cst_6 [1] : vector<2x8xf32> to vector<2xf32>
    %22 = vector.shape_cast %21 : vector<2xf32> to vector<2x1xf32>
    %23 = tpu.reciprocal %22 : vector<2x1xf32> -> vector<2x1xf32>
    %24 = vector.broadcast %23 : vector<2x1xf32> to vector<2x8xf32>
    %25 = arith.mulf %20, %24 : vector<2x8xf32>
    %26 = vector.shape_cast %25 : vector<2x8xf32> to vector<2x8x1xf32>
    %27 = vector.broadcast %26 : vector<2x8x1xf32> to vector<2x8x32xf32>
    %28 = arith.mulf %5, %27 : vector<2x8x32xf32>
    %cst_7 = arith.constant dense<0.000000e+00> : vector<2x32xf32>
    %29 = vector.multi_reduction <add>, %28, %cst_7 [1] : vector<2x8x32xf32> to vector<2x32xf32>
    %c0_8 = arith.constant 0 : index
    %c0_9 = arith.constant 0 : index
    %30 = vector.load %arg3[%c0_8, %c0_9] : memref<2x32xf32, #tpu.memory_space<vmem>>, vector<2x32xf32>
    tpu.vector_store %arg3[%c0_8, %c0_9], %29 {strides = array<i32>} : memref<2x32xf32, #tpu.memory_space<vmem>>, vector<2x32xf32>,
    %c0_10 = arith.constant 0 : index
    %c0_11 = arith.constant 0 : index
    %31 = vector.load %arg4[%c0_10, %c0_11] : memref<2x8xf32, #tpu.memory_space<vmem>>, vector<2x8xf32>
    tpu.vector_store %arg4[%c0_10, %c0_11], %25 {strides = array<i32>} : memref<2x8xf32, #tpu.memory_space<vmem>>, vector<2x8xf32>,
    return
  }
  func.func @transform_0(%arg0: i32) -> (i32, i32, i32) {
    %c0_i32 = arith.constant 0 : i32
    %c0_i32_0 = arith.constant 0 : i32
    %c0_i32_1 = arith.constant 0 : i32
    return %arg0, %c0_i32, %c0_i32_0 : i32, i32, i32
  }
  func.func @transform_1(%arg0: i32) -> (i32, i32) {
    %c0_i32 = arith.constant 0 : i32
    %c0_i32_0 = arith.constant 0 : i32
    %c0_i32_1 = arith.constant 0 : i32
    return %c0_i32, %c0_i32_0 : i32, i32
  }
  func.func @transform_2(%arg0: i32) -> (i32, i32) {
    %c0_i32 = arith.constant 0 : i32
    %c0_i32_0 = arith.constant 0 : i32
    return %arg0, %c0_i32 : i32, i32
  }
  func.func @transform_3(%arg0: i32) -> (i32, i32) {
    %c0_i32 = arith.constant 0 : i32
    %c0_i32_0 = arith.constant 0 : i32
    return %arg0, %c0_i32 : i32, i32
  }
}

</mosaic_0001>

<llo_original>
// kernel: tpu_custom_call.1
$region0: #{tpu_custom_call.1}
  #allocation0 [shape = 'u32[]', space=smem, size = 0x4, offset = 0x4, fixed_abs, tag = 'smem constant byte address 0x4 - core index']
  #allocation1 [shape = 'u32[144,128]{1,0:T(1,128)}', space=vmem, size = 0x12000, scoped, tag = 'internal scratch']
  %s0 = inlined_call_operand.vmem [shape: f32[2,32,8], index: 0, kind: input, shape index: {}]
  %s1 = inlined_call_operand.vmem [shape: f32[34,32], index: 1, kind: input, shape index: {}]
  %s2 = inlined_call_operand.hbm [shape: f32[2,32], index: 2, kind: output, shape index: {0}]
  %s3 = inlined_call_operand.hbm [shape: f32[2,8], index: 3, kind: output, shape index: {1}]
  %4 = xla_tuple %s2, %s3
  %s5 = sld [smem:[#allocation0]]
  $region26: #{tpu_custom_call.1} parent=0
    _
  %s7 = ssub.s32 1, %s5
  %s8 = scalar_select 0, %s7, %s5
  $region1: #{tpu_custom_call.1} parent=0
    #allocation2 [shape = 'u8[1024]{0}', space=vmem, size = 0x400, scoped, tag = 'output window, operand 0, single buffered']
    #allocation3 [shape = 's32[1]{0}', space=sflag, size = 0x4, scoped, tag = 'scoped memory for tpu_custom_call.1']
    #allocation4 [shape = 'u8[1024]{0}', space=vmem, size = 0x400, scoped, tag = 'output window, operand 1, single buffered']
    #allocation5 [shape = 's32[1]{0}', space=sflag, size = 0x4, scoped, tag = 'scoped memory for tpu_custom_call.1']
    %9 = vsyncpa [#allocation3], 0
    %10 = vsyncpa [#allocation5], 0
    // Predicated region
    $region2: #{tpu_custom_call.1} parent=1 // pred_check
      _
    $region3: #{tpu_custom_call.1} parent=1 // pred_check_branch
      %12 = sbr.rel (0) target = $region5
    $region4: #{tpu_custom_call.1} parent=1 // pred_region
      _
    $region5: #{tpu_custom_call.1} parent=1 // pred_fallthru
      _
    // Predicated region
    $region6: #{tpu_custom_call.1} parent=1 // pred_check
      _
    $region7: #{tpu_custom_call.1} parent=1 // pred_check_branch
      %14 = sbr.rel (0) target = $region9
    $region8: #{tpu_custom_call.1} parent=1 // pred_region
      _
    $region9: #{tpu_custom_call.1} parent=1 // pred_fallthru
      _
    %v15 = vld [vmem:[%s1] sm:$0xff]
    %v16 = vld [vmem:[%s1 + $0x8] sm:$0xff]
    %v17 = vld [vmem:[%s1 + $0x10] sm:$0xff]
    %v18 = vld [vmem:[%s1 + $0x18] sm:$0xff]
    %v19 = vld [vmem:[%s1 + $0x20] sm:$0x3]
    %v20 = vld [vmem:[%s0] sm:$0xff]
    %v21 = vld [vmem:[%s0 + $0x8] sm:$0xff]
    %v22 = vld [vmem:[%s0 + $0x10] sm:$0xff]
    %v23 = vld [vmem:[%s0 + $0x18] sm:$0xff]
    %v24 = vld [vmem:[%s0 + $0x20] sm:$0xff]
    %v25 = vld [vmem:[%s0 + $0x28] sm:$0xff]
    %v26 = vld [vmem:[%s0 + $0x30] sm:$0xff]
    %v27 = vld [vmem:[%s0 + $0x38] sm:$0xff]
    %28 = vxpose.xlu0.b32.start [1/16] %v20, 128
    %29 = vxpose.xlu0.b32.cont [2/16] %v21, 128
    %30 = vxpose.xlu0.b32.cont [3/16] %v22, 128
    %31 = vxpose.xlu0.b32.cont [4/16] %v23, 128
    %32 = vxpose.xlu0.b32.cont [5/16] 0.0, 128
    %33 = vxpose.xlu0.b32.cont [6/16] 0.0, 128
    %34 = vxpose.xlu0.b32.cont [7/16] 0.0, 128
    %35 = vxpose.xlu0.b32.cont [8/16] 0.0, 128
    %36 = vxpose.xlu0.b32.cont [9/16] 0.0, 128
    %37 = vxpose.xlu0.b32.cont [10/16] 0.0, 128
    %38 = vxpose.xlu0.b32.cont [11/16] 0.0, 128
    %39 = vxpose.xlu0.b32.cont [12/16] 0.0, 128
    %40 = vxpose.xlu0.b32.cont [13/16] 0.0, 128
    %41 = vxpose.xlu0.b32.cont [14/16] 0.0, 128
    %42 = vxpose.xlu0.b32.cont [15/16] 0.0, 128
    %43 = vxpose.xlu0.b32.end [16/16] 0.0, 128
    %v44 = vpop.trf.xlu0
    %v45 = vpop.trf.xlu0
    %v46 = vpop.trf.xlu0
    %v47 = vpop.trf.xlu0
    %v48 = vpop.trf.xlu0
    %v49 = vpop.trf.xlu0
    %v50 = vpop.trf.xlu0
    %v51 = vpop.trf.xlu0
    %v52 = vpop.trf.xlu0
    %v53 = vpop.trf.xlu0
    %v54 = vpop.trf.xlu0
    %v55 = vpop.trf.xlu0
    %v56 = vpop.trf.xlu0
    %v57 = vpop.trf.xlu0
    %v58 = vpop.trf.xlu0
    %v59 = vpop.trf.xlu0
    %60 = vxpose.xlu0.b32.start [1/16] %v24, 128
    %61 = vxpose.xlu0.b32.cont [2/16] %v25, 128
    %62 = vxpose.xlu0.b32.cont [3/16] %v26, 128
    %63 = vxpose.xlu0.b32.cont [4/16] %v27, 128
    %64 = vxpose.xlu0.b32.cont [5/16] 0.0, 128
    %65 = vxpose.xlu0.b32.cont [6/16] 0.0, 128
    %66 = vxpose.xlu0.b32.cont [7/16] 0.0, 128
    %67 = vxpose.xlu0.b32.cont [8/16] 0.0, 128
    %68 = vxpose.xlu0.b32.cont [9/16] 0.0, 128
    %69 = vxpose.xlu0.b32.cont [10/16] 0.0, 128
    %70 = vxpose.xlu0.b32.cont [11/16] 0.0, 128
    %71 = vxpose.xlu0.b32.cont [12/16] 0.0, 128
    %72 = vxpose.xlu0.b32.cont [13/16] 0.0, 128
    %73 = vxpose.xlu0.b32.cont [14/16] 0.0, 128
    %74 = vxpose.xlu0.b32.cont [15/16] 0.0, 128
    %75 = vxpose.xlu0.b32.end [16/16] 0.0, 128
    %v76 = vpop.trf.xlu0
    %v77 = vpop.trf.xlu0
    %v78 = vpop.trf.xlu0
    %v79 = vpop.trf.xlu0
    %v80 = vpop.trf.xlu0
    %v81 = vpop.trf.xlu0
    %v82 = vpop.trf.xlu0
    %v83 = vpop.trf.xlu0
    %v84 = vpop.trf.xlu0
    %v85 = vpop.trf.xlu0
    %v86 = vpop.trf.xlu0
    %v87 = vpop.trf.xlu0
    %v88 = vpop.trf.xlu0
    %v89 = vpop.trf.xlu0
    %v90 = vpop.trf.xlu0
    %v91 = vpop.trf.xlu0
    %v92 = vlaneseq
    %v93 = vshrl.u32 %v92, 7
    %v94 = vsub.s32 0, %v93
    %v95 = vrot.slane %v19, %v94
    %vm96 = vcmask 261120
    %v98 = vsel %vm96, %v44, 0
    %v101 = vsel %vm96, %v76, 0
    %103 = vmatprep.subr.mxu0 0.0
    %104 = vmatpush1.msra.mxu0 0.0
    %105 = vmatprep.subr.mxu0 0.0
    %106 = vmatpush1.msra.mxu0 0.0
    %107 = vmatprep.subr.mxu0 0.0
    %108 = vmatpush1.msra.mxu0 0.0
    %109 = vmatprep.subr.mxu0 0.0
    %110 = vmatpush1.msra.mxu0 0.0
    %111 = vmatprep.subr.mxu0 0.0
    %112 = vmatpush1.msra.mxu0 0.0
    %113 = vmatprep.subr.mxu0 0.0
    %114 = vmatpush1.msra.mxu0 0.0
    %115 = vmatprep.subr.mxu0 0.0
    %116 = vmatpush1.msra.mxu0 0.0
    %117 = vmatprep.subr.mxu0 0.0
    %118 = vmatpush1.msra.mxu0 0.0
    %119 = vmatprep.subr.mxu0 0.0
    %120 = vmatpush1.msra.mxu0 0.0
    %121 = vmatprep.subr.mxu0 0.0
    %122 = vmatpush1.msra.mxu0 0.0
    %123 = vmatprep.subr.mxu0 0.0
    %124 = vmatpush1.msra.mxu0 0.0
    %125 = vmatprep.subr.mxu0 0.0
    %126 = vmatpush1.msra.mxu0 0.0
    %127 = vmatprep.subr.mxu0 0.0
    %128 = vmatpush1.msra.mxu0 %v18
    %129 = vmatprep.subr.mxu0 0.0
    %130 = vmatpush1.msra.mxu0 %v17
    %131 = vmatprep.subr.mxu0 0.0
    %132 = vmatpush1.msra.mxu0 %v16
    %133 = vmatprep.subr.mxu0 0.0
    %134 = vmatpush1.msra.mxu0 %v15
    %135 = vmatprep.subr.mxu0 0.0
    %136 = vmatpush2.msra.mxu0 0.0
    %137 = vmatprep.subr.mxu0 0.0
    %138 = vmatpush2.msra.mxu0 0.0
    %139 = vmatprep.subr.mxu0 0.0
    %140 = vmatpush2.msra.mxu0 0.0
    %141 = vmatprep.subr.mxu0 0.0
    %142 = vmatpush2.msra.mxu0 0.0
    %143 = vmatprep.subr.mxu0 0.0
    %144 = vmatpush2.msra.mxu0 0.0
    %145 = vmatprep.subr.mxu0 0.0
    %146 = vmatpush2.msra.mxu0 0.0
    %147 = vmatprep.subr.mxu0 0.0
    %148 = vmatpush2.msra.mxu0 0.0
    %149 = vmatprep.subr.mxu0 0.0
    %150 = vmatpush2.msra.mxu0 0.0
    %151 = vmatprep.subr.mxu0 0.0
    %152 = vmatpush2.msra.mxu0 0.0
    %153 = vmatprep.subr.mxu0 0.0
    %154 = vmatpush2.msra.mxu0 0.0
    %155 = vmatprep.subr.mxu0 0.0
    %156 = vmatpush2.msra.mxu0 0.0
    %157 = vmatprep.subr.mxu0 0.0
    %158 = vmatpush2.msra.mxu0 0.0
    %159 = vmatprep.subr.mxu0 0.0
    %160 = vmatpush2.msra.mxu0 0.0
    %161 = vmatprep.subr.mxu0 0.0
    %162 = vmatpush2.msra.mxu0 0.0
    %163 = vmatprep.subr.mxu0 0.0
    %164 = vmatpush2.msra.mxu0 0.0
    %165 = vmatprep.subr.mxu0 0.0
    %166 = vmatpush2.msra.mxu0 0.0
    %167 = vmatprep.mubr.f32.mxu0 0.0
    %168 = vmatmul.mubr.f32.gmra.mxu0 %v98
    %v169 = vpop.f32.mrf.mxu0
    %v170 = vadd.f32 %v95, %v169
    %v171 = vpop.f32.mrf.mxu0
    %172 = vmatprep.mubr.f32.mxu0 0.0
    %173 = vmatmul.mubr.f32.gmra.mxu0 %v101
    %v174 = vpop.f32.mrf.mxu0
    %v175 = vadd.f32 %v95, %v174
    %v176 = vpop.f32.mrf.mxu0
    %177 = vdwg.mxu0
    %v178 = vtanh.pop %v170
    %v179 = vtanh.pop %v175
    %v180 = vlaneseq
    %v181 = vshrl.u32 %v180, 7
    %v182 = vsub.s32 1, %v181
    %v183 = vrot.slane %v19, %v182
    %v184 = vmul.f32 %v178, %v183
    %v185 = vmul.f32 %v179, %v183
    %v186 = vsel %vm96, %v184, 0.0
    %187 = vadd.xlane.f32.xlu0 %v186
    %v188 = vpop.xlane.xlu0 %187
    %v189 = vsel %vm96, %v185, 0.0
    %190 = vadd.xlane.f32.xlu0 %v189
    %v191 = vpop.xlane.xlu0 %190
    %v194 = vlaneseq
    %v195 = vand.u32 %v194, 127
    %v196 = vlaneseq
    %v197 = vshrl.u32 %v196, 7
    %v198 = vsub.s32 %v195, %v197
    %v199 = vrot.slane %v188, %v198
    %v200 = vlaneseq
    %v201 = vshrl.u32 %v200, 7
    %v202 = vsub.s32 %v195, %v201
    %v203 = vrot.slane %v191, %v202
    %vm204 = vcmask 1041409
    %v205 = vsel %vm204, %v203, %v199
    %vm207 = vcmask 58368
    %v208 = vsel %vm207, %v205, -inf
    %209 = vmax.xlane.f32.xlu0 %v208
    %v210 = vpop.xlane.xlu0 %209
    %v212 = vlaneseq
    %v213 = vshrl.u32 %v212, 7
    %v214 = vsub.s32 0, %v213
    %v215 = vrot.slane %v210, %v214
    %v216 = vlaneseq
    %v217 = vshrl.u32 %v216, 7
    %v218 = vsub.s32 1, %v217
    %v219 = vrot.slane %v210, %v218
    %v222 = vsub.f32 %v188, %v215
    %v223 = vsub.f32 %v191, %v219
    %v224 = vmul.f32 %v222, 1.442695
    %v225 = vpow.pop %v224
    %v226 = vmul.f32 %v223, 1.442695
    %v227 = vpow.pop %v226
    %230 = vset.pattern.permute.xlu0 0
    %231 = vperm.xlu0 %230, %v225
    %v232 = vpop.permute.xlu0 %231
    %233 = vset.pattern.permute.xlu0 0
    %234 = vperm.xlu0 %233, %v227
    %v235 = vpop.permute.xlu0 %234
    %v236 = vlaneseq
    %v237 = vshrl.u32 %v236, 7
    %v238 = vsub.s32 %v195, %v237
    %v239 = vrot.slane %v232, %v238
    %v240 = vlaneseq
    %v241 = vshrl.u32 %v240, 7
    %v242 = vsub.s32 %v195, %v241
    %v243 = vrot.slane %v235, %v242
    %v244 = vsel %vm204, %v243, %v239
    %v246 = vsel %vm207, %v244, 0.0
    %247 = vadd.xlane.f32.xlu0 %v246
    %v248 = vpop.xlane.xlu0 %247
    %v249 = vrcp.pop %v248
    %v251 = vlaneseq
    %v252 = vshrl.u32 %v251, 7
    %v253 = vsub.s32 0, %v252
    %v254 = vrot.slane %v249, %v253
    %v255 = vlaneseq
    %v256 = vshrl.u32 %v255, 7
    %v257 = vsub.s32 1, %v256
    %v258 = vrot.slane %v249, %v257
    %v261 = vmul.f32 %v225, %v254
    %v262 = vmul.f32 %v227, %v258
    %264 = vset.pattern.permute.xlu0 0
    %265 = vperm.xlu0 %264, %v261
    %v266 = vpop.permute.xlu0 %265
    %269 = vset.pattern.permute.xlu0 0
    %270 = vperm.xlu0 %269, %v262
    %v271 = vpop.permute.xlu0 %270
    %v273 = vmul.f32 %v44, %v266
    %v274 = vmul.f32 %v76, %v271
    %v275 = vsel %vm96, %v273, 0.0
    %v276 = vrot.slane %v275, 4
    %v277 = vadd.f32 %v275, %v276
    %v278 = vrot.slane %v277, 2
    %v279 = vadd.f32 %v277, %v278
    %v280 = vrot.slane %v279, 1
    %v281 = vadd.f32 %v279, %v280
    %v282 = vsel %vm96, %v274, 0.0
    %v283 = vrot.slane %v282, 4
    %v284 = vadd.f32 %v282, %v283
    %v285 = vrot.slane %v284, 2
    %v286 = vadd.f32 %v284, %v285
    %v287 = vrot.slane %v286, 1
    %v288 = vadd.f32 %v286, %v287
    %v291 = vsel %vm204, %v288, %v281
    %vm293 = vcmask 254976
    %294 = vst.msk [vmem:[#allocation2] sm:$0x3] %vm293, %v291
    %v295 = vlaneseq
    %v296 = vshrl.u32 %v295, 7
    %v297 = vsub.s32 %v195, %v296
    %v298 = vrot.slane %v266, %v297
    %v299 = vlaneseq
    %v300 = vshrl.u32 %v299, 7
    %v301 = vsub.s32 %v195, %v300
    %v302 = vrot.slane %v271, %v301
    %v303 = vsel %vm204, %v302, %v298
    %305 = vst.msk [vmem:[#allocation4] sm:$0x3] %vm207, %v303
    // Predicated region
    $region10: #{tpu_custom_call.1} parent=1 // pred_check
      _
    $region11: #{tpu_custom_call.1} parent=1 // pred_check_branch
      %307 = sbr.rel (0) target = $region13
    $region12: #{tpu_custom_call.1} parent=1 // pred_region
      %s309 = ssub.s32 32, 32
      %310 = vsyncadd [#allocation3], %s309
      %s312 = sshll.u32 [#allocation2], 4
      %s313 = int_to_ptr.vmem [resolvable:$true] %s312
      %315 = dma.vmem_to_hbm [thread:$0]  %s313, 32, %s2, [#allocation3]
    $region13: #{tpu_custom_call.1} parent=1 // pred_fallthru
      _
    // Predicated region
    $region14: #{tpu_custom_call.1} parent=1 // pred_check
      _
    $region15: #{tpu_custom_call.1} parent=1 // pred_check_branch
      %317 = sbr.rel (0) target = $region17
    $region16: #{tpu_custom_call.1} parent=1 // pred_region
      %s319 = ssub.s32 32, 32
      %320 = vsyncadd [#allocation5], %s319
      %s322 = sshll.u32 [#allocation4], 4
      %s323 = int_to_ptr.vmem [resolvable:$true] %s322
      %325 = dma.vmem_to_hbm [thread:$0]  %s323, 32, %s3, [#allocation5]
    $region17: #{tpu_custom_call.1} parent=1 // pred_fallthru
      _
    // Predicated region
    $region18: #{tpu_custom_call.1} parent=1 // pred_check
      _
    $region19: #{tpu_custom_call.1} parent=1 // pred_check_branch
      %327 = sbr.rel (0) target = $region21
    $region20: #{tpu_custom_call.1} parent=1 // pred_region
      %328 = dma.done [#allocation3], 32
    $region21: #{tpu_custom_call.1} parent=1 // pred_fallthru
      _
    // Predicated region
    $region22: #{tpu_custom_call.1} parent=1 // pred_check
      _
    $region23: #{tpu_custom_call.1} parent=1 // pred_check_branch
      %330 = sbr.rel (0) target = $region25
    $region24: #{tpu_custom_call.1} parent=1 // pred_region
      %331 = dma.done [#allocation5], 32
    $region25: #{tpu_custom_call.1} parent=1 // pred_fallthru
      _
    %332 = vsyncpa [#allocation3], 1
    %333 = vsyncpa [#allocation5], 1

</llo_original>
